<compile_context>
chip_gen: v6e
topology: v6e:2x2x1
jax: 0.10.0
libtpu: 0.0.40
codegen_flags: <defaults>
</compile_context>

<pallas_src>
import functools

import jax
import jax.numpy as jnp
import numpy as np
from jax.experimental import pallas as pl
from jax.experimental.pallas import tpu as pltpu


def _mskd_cakd_kernel(s_ref, t_ref, ws_ref, bs_ref, wt_ref, bt_ref, out_ref,
                      *, s_total, needs_mask):
    """Per-tile KD hot path.

    s_ref  : (Cs, TILE_S)  student features (voxels on lanes)
    t_ref  : (Ct, TILE_S)  teacher features
    ws_ref : (K, Cs)       student projector weight^T, pre-scaled by 1/tau
    bs_ref : (K, 1)        student projector bias,     pre-scaled by 1/tau
    wt_ref : (K, Ct)       teacher projector weight^T, pre-scaled by 1/tau
    bt_ref : (K, 1)        teacher projector bias,     pre-scaled by 1/tau
    out_ref: (K, 128)      resident partial-sum accumulator for this
                           (batch, split) output block
    """
    tile_s = s_ref.shape[-1]

    # zero this (batch, split) accumulator on its first inner step
    @pl.when(pl.program_id(2) == 0)
    def _():
        out_ref[...] = jnp.zeros_like(out_ref)

    s = s_ref[...].astype(jnp.float32)
    t = t_ref[...].astype(jnp.float32)

    # 1x1x1 Conv3d projector == channel matmul (+bias); 1/tau already folded.
    s_logits = (jnp.dot(ws_ref[...], s, preferred_element_type=jnp.float32)
                + bs_ref[...])                                  # (K, TILE_S)
    t_logits = (jnp.dot(wt_ref[...], t, preferred_element_type=jnp.float32)
                + bt_ref[...])                                  # (K, TILE_S)

    # log_softmax over classes (axis 0 = sublanes) for the student
    s_max = jnp.max(s_logits, axis=0, keepdims=True)
    s_shift = s_logits - s_max
    s_lse = jnp.log(jnp.sum(jnp.exp(s_shift), axis=0, keepdims=True))
    log_s = s_shift - s_lse

    # softmax + log_softmax over classes for the teacher.
    # One exact divide on the (1, TILE_S) column sums, then (K, TILE_S) mults
    # (cheaper than a broadcast (K, TILE_S) divide on the VPU).
    t_max = jnp.max(t_logits, axis=0, keepdims=True)
    t_shift = t_logits - t_max
    t_exp = jnp.exp(t_shift)
    t_sum = jnp.sum(t_exp, axis=0, keepdims=True)               # (1, TILE_S)
    soft_t = t_exp * (1.0 / t_sum)
    log_t = t_shift - jnp.log(t_sum)

    # KL pointwise term: target * (log(target) - log_softmax(student))
    kl = soft_t * (log_t - log_s)                               # (K, TILE_S)

    if needs_mask:
        # mask voxel columns past the true spatial extent (ragged last tile /
        # zero-padded tiny inputs)
        base = (pl.program_id(1) * pl.num_programs(2)
                + pl.program_id(2)) * tile_s
        col = base + jax.lax.broadcasted_iota(jnp.int32, (1, tile_s), 1)
        kl = jnp.where(col < s_total, kl, 0.0)

    # fold lanes into the 128-wide accumulator: pure VPU adds, no cross-lane
    # reduce on the per-tile critical path.
    acc = kl[:, 0:128]
    for c in range(1, tile_s // 128):
        acc = acc + kl[:, c * 128:(c + 1) * 128]
    out_ref[...] += acc


def mskd_cakd_v4_loss(student, teacher, ws, bs, wt, bt,
                      *, tau=1.0, loss_weight=1.0, tile_s=2048, n_split=2):
    """JAX wrapper reproducing MSKD_CAKD_V4.forward (interpolate=False).

    student: (B, Cs, D, H, W); teacher: (B, Ct, D, H, W)  — any float dtype.
    ws: (Cs, K), bs: (K,) — student 1x1x1 Conv3d projector as matmul params.
    wt: (Ct, K), bt: (K,) — teacher projector.
    """
    B, Cs, D, H, W = student.shape
    Bt, Ct, Dt, Ht, Wt = teacher.shape
    assert (B, D, H, W) == (Bt, Dt, Ht, Wt)
    assert student.shape[-1] == teacher.shape[-1]
    K = ws.shape[1]

    S = D * H * W                         # true voxels per batch element
    s3 = student.reshape(B, Cs, S)        # free reshape: NCDHW stays contiguous
    t3 = teacher.reshape(B, Ct, S)

    if S < 128:
        # tiny spatial extent: zero-pad to one full 128-lane tile
        # (padded columns are masked out inside the kernel)
        pad = 128 - S
        s3 = jnp.pad(s3, ((0, 0), (0, 0), (0, pad)))
        t3 = jnp.pad(t3, ((0, 0), (0, 0), (0, pad)))

    # tile size: multiple of 128 lanes, no bigger than (padded) S.
    # Per-tile VMEM footprint is tiny (≈ (Cs+Ct)*tile_s*dtype_bytes, double
    # buffered), so 2048 fits comfortably under v7x's 64 MiB VMEM as well.
    tile_s = max(128, (min(int(tile_s), max(S, 128)) // 128) * 128)
    num_tiles = pl.cdiv(max(S, 128), tile_s)
    needs_mask = (S % tile_s) != 0        # ragged last tile or padded input

    # split the voxel-tile stream into parallel groups (v7x: 2 TensorCores)
    n_split = int(n_split)
    if n_split < 1 or num_tiles % n_split != 0:
        n_split = 1
    num_inner = num_tiles // n_split

    # fold 1/tau into the transposed projector weights & biases (done once,
    # on tiny tensors, in JAX)
    inv_tau = jnp.float32(1.0 / float(tau))
    w_s = jnp.asarray(ws, jnp.float32).T * inv_tau          # (K, Cs)
    w_t = jnp.asarray(wt, jnp.float32).T * inv_tau          # (K, Ct)
    b_s = (jnp.asarray(bs, jnp.float32) * inv_tau).reshape(K, 1)
    b_t = (jnp.asarray(bt, jnp.float32) * inv_tau).reshape(K, 1)

    kernel = functools.partial(_mskd_cakd_kernel,
                               s_total=S, needs_mask=needs_mask)

    partials = pl.pallas_call(
        kernel,
        out_shape=jax.ShapeDtypeStruct((B, n_split, K, 128), jnp.float32),
        grid_spec=pltpu.PrefetchScalarGridSpec(
            num_scalar_prefetch=0,
            grid=(B, n_split, num_inner),
            in_specs=[
                pl.BlockSpec((None, Cs, tile_s),
                             lambda b, p, k: (b, 0, p * num_inner + k)),
                pl.BlockSpec((None, Ct, tile_s),
                             lambda b, p, k: (b, 0, p * num_inner + k)),
                pl.BlockSpec((K, Cs), lambda b, p, k: (0, 0)),   # ws^T / tau
                pl.BlockSpec((K, 1), lambda b, p, k: (0, 0)),    # bs / tau
                pl.BlockSpec((K, Ct), lambda b, p, k: (0, 0)),   # wt^T / tau
                pl.BlockSpec((K, 1), lambda b, p, k: (0, 0)),    # bt / tau
            ],
            out_specs=pl.BlockSpec((None, None, K, 128),
                                   lambda b, p, k: (b, p, 0, 0)),
        ),
        compiler_params=pltpu.CompilerParams(
            dimension_semantics=("parallel", "parallel", "arbitrary")),
    )(s3, t3, w_s, b_s, w_t, b_t)

    # F.kl_div(..., reduction='mean') divides by the total element count N*K
    total = jnp.sum(partials)
    loss = total / jnp.float32(B * S * K)
    return jnp.float32(loss_weight) * loss


def _reference_loss(student, teacher, ws, bs, wt, bt, tau, loss_weight):
    """Pure-JAX reference mirroring the PyTorch forward."""
    s = jnp.einsum("bcdhw,ck->bdhwk", student.astype(jnp.float32),
                   ws.astype(jnp.float32)) + bs.astype(jnp.float32)
    t = jnp.einsum("bcdhw,ck->bdhwk", teacher.astype(jnp.float32),
                   wt.astype(jnp.float32)) + bt.astype(jnp.float32)
    K = s.shape[-1]
    s = (s / tau).reshape(-1, K)
    t = (t / tau).reshape(-1, K)
    log_s = jax.nn.log_softmax(s, axis=-1)
    soft_t = jax.nn.softmax(t, axis=-1)
    kl = soft_t * (jnp.log(soft_t) - log_s)
    return loss_weight * jnp.mean(kl)


if __name__ == "__main__":
    key = jax.random.PRNGKey(0)
    k1, k2, k3, k4, k5, k6 = jax.random.split(key, 6)

    s_in, t_in, num_classes = 4, 6, 5
    ws = 0.1 * jax.random.normal(k3, (s_in, num_classes), dtype=jnp.float32)
    bs = 0.1 * jax.random.normal(k4, (num_classes,), dtype=jnp.float32)
    wt = 0.1 * jax.random.normal(k5, (t_in, num_classes), dtype=jnp.float32)
    bt = 0.1 * jax.random.normal(k6, (num_classes,), dtype=jnp.float32)

    # ---- case 1: float32 inputs, spatial size divides the tile (S = 256) ----
    B, D, H, W = 2, 4, 8, 8
    student = jax.random.normal(k1, (B, s_in, D, H, W), dtype=jnp.float32)
    teacher = jax.random.normal(k2, (B, t_in, D, H, W), dtype=jnp.float32)

    loss = jax.block_until_ready(
        mskd_cakd_v4_loss(student, teacher, ws, bs, wt, bt,
                          tau=1.0, loss_weight=1.0))
    ref = _reference_loss(student, teacher, ws, bs, wt, bt, 1.0, 1.0)
    np.testing.assert_allclose(np.asarray(loss), np.asarray(ref),
                               rtol=1e-4, atol=1e-6)

    # ---- case 2: bf16 inputs, ragged spatial size (S = 192), tau != 1 ----
    B2, D2, H2, W2 = 1, 3, 8, 8
    student2 = jax.random.normal(k1, (B2, s_in, D2, H2, W2)).astype(jnp.bfloat16)
    teacher2 = jax.random.normal(k2, (B2, t_in, D2, H2, W2)).astype(jnp.bfloat16)

    loss2 = jax.block_until_ready(
        mskd_cakd_v4_loss(student2, teacher2, ws, bs, wt, bt,
                          tau=2.0, loss_weight=0.5))
    ref2 = _reference_loss(student2, teacher2, ws, bs, wt, bt, 2.0, 0.5)
    np.testing.assert_allclose(np.asarray(loss2), np.asarray(ref2),
                               rtol=1e-4, atol=1e-6)

    print("KERNEL_OK")
</pallas_src>

<mosaic_0001>
module attributes {stable_mosaic.version = 11 : i64} {
  func.func @_mskd_cakd_kernel(%arg0: i32, %arg1: i32, %arg2: i32, %arg3: memref<1x4x256xf32, #tpu.memory_space<vmem>>, %arg4: memref<1x6x256xf32, #tpu.memory_space<vmem>>, %arg5: memref<5x4xf32, #tpu.memory_space<vmem>>, %arg6: memref<5x1xf32, #tpu.memory_space<vmem>>, %arg7: memref<5x6xf32, #tpu.memory_space<vmem>>, %arg8: memref<5x1xf32, #tpu.memory_space<vmem>>, %arg9: memref<1x1x5x128xf32, #tpu.memory_space<vmem>>) attributes {dimension_semantics = [#tpu.dimension_semantics<parallel>, #tpu.dimension_semantics<parallel>, #tpu.dimension_semantics<arbitrary>], iteration_bounds = array<i64: 2, 1, 1>, scalar_prefetch = 0 : i64, scratch_operands = 0 : i64, tpu.core_type = #tpu.core_type<tc>, window_params = [{transform_indices = @transform_0, window_bounds = array<i64: 1, 4, 256>}, {transform_indices = @transform_1, window_bounds = array<i64: 1, 6, 256>}, {pipeline_mode = #tpu.pipeline_mode<synchronous>, transform_indices = @transform_2, window_bounds = array<i64: 5, 4>}, {pipeline_mode = #tpu.pipeline_mode<synchronous>, transform_indices = @transform_3, window_bounds = array<i64: 5, 1>}, {pipeline_mode = #tpu.pipeline_mode<synchronous>, transform_indices = @transform_4, window_bounds = array<i64: 5, 6>}, {pipeline_mode = #tpu.pipeline_mode<synchronous>, transform_indices = @transform_5, window_bounds = array<i64: 5, 1>}, {transform_indices = @transform_6, window_bounds = array<i64: 1, 1, 5, 128>}]} {
    %c0_i32 = arith.constant 0 : i32
    %0 = arith.cmpi eq, %arg2, %c0_i32 : i32
    %1 = arith.extui %0 : i1 to i32
    %c0_i32_0 = arith.constant 0 : i32
    %2 = arith.cmpi ne, %1, %c0_i32_0 : i32
    scf.if %2 {
      %cst_28 = arith.constant 0.000000e+00 : f32
      %52 = vector.broadcast %cst_28 : f32 to vector<5x128xf32>
      %c0_29 = arith.constant 0 : index
      %c0_30 = arith.constant 0 : index
      %c0_31 = arith.constant 0 : index
      %c0_32 = arith.constant 0 : index
      %53 = vector.load %arg9[%c0_29, %c0_30, %c0_31, %c0_32] : memref<1x1x5x128xf32, #tpu.memory_space<vmem>>, vector<1x1x5x128xf32>
      %54 = vector.shape_cast %53 : vector<1x1x5x128xf32> to vector<5x128xf32>
      %55 = vector.shape_cast %52 : vector<5x128xf32> to vector<1x1x5x128xf32>
      tpu.vector_store %arg9[%c0_29, %c0_30, %c0_31, %c0_32], %55 {strides = array<i32>} : memref<1x1x5x128xf32, #tpu.memory_space<vmem>>, vector<1x1x5x128xf32>,
    } else {
    }
    %c0 = arith.constant 0 : index
    %c0_1 = arith.constant 0 : index
    %c0_2 = arith.constant 0 : index
    %3 = vector.load %arg3[%c0, %c0_1, %c0_2] : memref<1x4x256xf32, #tpu.memory_space<vmem>>, vector<1x4x256xf32>
    %4 = vector.shape_cast %3 : vector<1x4x256xf32> to vector<4x256xf32>
    %c0_3 = arith.constant 0 : index
    %c0_4 = arith.constant 0 : index
    %c0_5 = arith.constant 0 : index
    %5 = vector.load %arg4[%c0_3, %c0_4, %c0_5] : memref<1x6x256xf32, #tpu.memory_space<vmem>>, vector<1x6x256xf32>
    %6 = vector.shape_cast %5 : vector<1x6x256xf32> to vector<6x256xf32>
    %c0_6 = arith.constant 0 : index
    %c0_7 = arith.constant 0 : index
    %7 = vector.load %arg5[%c0_6, %c0_7] : memref<5x4xf32, #tpu.memory_space<vmem>>, vector<5x4xf32>
    %cst = arith.constant dense<0.000000e+00> : vector<5x256xf32>
    %8 = tpu.matmul %7, %4, %cst {dimension_numbers = #tpu.dot_dimension_numbers<[1], [0], [0], [1], [0, 0, 1, 1], [], []>} : vector<5x4xf32>, vector<4x256xf32>, vector<5x256xf32> -> vector<5x256xf32>
    %c0_8 = arith.constant 0 : index
    %c0_9 = arith.constant 0 : index
    %9 = vector.load %arg6[%c0_8, %c0_9] : memref<5x1xf32, #tpu.memory_space<vmem>>, vector<5x1xf32>
    %10 = vector.broadcast %9 : vector<5x1xf32> to vector<5x256xf32>
    %11 = arith.addf %8, %10 : vector<5x256xf32>
    %c0_10 = arith.constant 0 : index
    %c0_11 = arith.constant 0 : index
    %12 = vector.load %arg7[%c0_10, %c0_11] : memref<5x6xf32, #tpu.memory_space<vmem>>, vector<5x6xf32>
    %cst_12 = arith.constant dense<0.000000e+00> : vector<5x256xf32>
    %13 = tpu.matmul %12, %6, %cst_12 {dimension_numbers = #tpu.dot_dimension_numbers<[1], [0], [0], [1], [0, 0, 1, 1], [], []>} : vector<5x6xf32>, vector<6x256xf32>, vector<5x256xf32> -> vector<5x256xf32>
    %c0_13 = arith.constant 0 : index
    %c0_14 = arith.constant 0 : index
    %14 = vector.load %arg8[%c0_13, %c0_14] : memref<5x1xf32, #tpu.memory_space<vmem>>, vector<5x1xf32>
    %15 = vector.broadcast %14 : vector<5x1xf32> to vector<5x256xf32>
    %16 = arith.addf %13, %15 : vector<5x256xf32>
    %cst_15 = arith.constant dense<0xFF800000> : vector<256xf32>
    %17 = vector.multi_reduction <maximumf>, %11, %cst_15 [0] : vector<5x256xf32> to vector<256xf32>
    %18 = vector.shape_cast %17 : vector<256xf32> to vector<1x256xf32>
    %19 = vector.broadcast %18 : vector<1x256xf32> to vector<5x256xf32>
    %20 = arith.subf %11, %19 : vector<5x256xf32>
    %21 = math.exp %20 : vector<5x256xf32>
    %cst_16 = arith.constant dense<0.000000e+00> : vector<256xf32>
    %22 = vector.multi_reduction <add>, %21, %cst_16 [0] : vector<5x256xf32> to vector<256xf32>
    %23 = vector.shape_cast %22 : vector<256xf32> to vector<1x256xf32>
    %24 = math.log %23 : vector<1x256xf32>
    %25 = vector.broadcast %24 : vector<1x256xf32> to vector<5x256xf32>
    %26 = arith.subf %20, %25 : vector<5x256xf32>
    %cst_17 = arith.constant dense<0xFF800000> : vector<256xf32>
    %27 = vector.multi_reduction <maximumf>, %16, %cst_17 [0] : vector<5x256xf32> to vector<256xf32>
    %28 = vector.shape_cast %27 : vector<256xf32> to vector<1x256xf32>
    %29 = vector.broadcast %28 : vector<1x256xf32> to vector<5x256xf32>
    %30 = arith.subf %16, %29 : vector<5x256xf32>
    %31 = math.exp %30 : vector<5x256xf32>
    %cst_18 = arith.constant dense<0.000000e+00> : vector<256xf32>
    %32 = vector.multi_reduction <add>, %31, %cst_18 [0] : vector<5x256xf32> to vector<256xf32>
    %33 = vector.shape_cast %32 : vector<256xf32> to vector<1x256xf32>
    %cst_19 = arith.constant 1.000000e+00 : f32
    %34 = vector.broadcast %cst_19 : f32 to vector<1x256xf32>
    %35 = arith.divf %34, %33 : vector<1x256xf32>
    %36 = vector.broadcast %35 : vector<1x256xf32> to vector<5x256xf32>
    %37 = arith.mulf %31, %36 : vector<5x256xf32>
    %38 = math.log %33 : vector<1x256xf32>
    %39 = vector.broadcast %38 : vector<1x256xf32> to vector<5x256xf32>
    %40 = arith.subf %30, %39 : vector<5x256xf32>
    %41 = arith.subf %40, %26 : vector<5x256xf32>
    %42 = arith.mulf %37, %41 : vector<5x256xf32>
    %43 = vector.extract_strided_slice %42 {offsets = [0, 0], sizes = [5, 128], strides = [1, 1]} : vector<5x256xf32> to vector<5x128xf32>
    %44 = vector.extract_strided_slice %42 {offsets = [0, 128], sizes = [5, 128], strides = [1, 1]} : vector<5x256xf32> to vector<5x128xf32>
    %45 = arith.addf %43, %44 : vector<5x128xf32>
    %c0_20 = arith.constant 0 : index
    %c0_21 = arith.constant 0 : index
    %c0_22 = arith.constant 0 : index
    %c0_23 = arith.constant 0 : index
    %46 = vector.load %arg9[%c0_20, %c0_21, %c0_22, %c0_23] : memref<1x1x5x128xf32, #tpu.memory_space<vmem>>, vector<1x1x5x128xf32>
    %47 = vector.shape_cast %46 : vector<1x1x5x128xf32> to vector<5x128xf32>
    %48 = arith.addf %47, %45 : vector<5x128xf32>
    %c0_24 = arith.constant 0 : index
    %c0_25 = arith.constant 0 : index
    %c0_26 = arith.constant 0 : index
    %c0_27 = arith.constant 0 : index
    %49 = vector.load %arg9[%c0_24, %c0_25, %c0_26, %c0_27] : memref<1x1x5x128xf32, #tpu.memory_space<vmem>>, vector<1x1x5x128xf32>
    %50 = vector.shape_cast %49 : vector<1x1x5x128xf32> to vector<5x128xf32>
    %51 = vector.shape_cast %48 : vector<5x128xf32> to vector<1x1x5x128xf32>
    tpu.vector_store %arg9[%c0_24, %c0_25, %c0_26, %c0_27], %51 {strides = array<i32>} : memref<1x1x5x128xf32, #tpu.memory_space<vmem>>, vector<1x1x5x128xf32>,
    return
  }
  func.func @transform_0(%arg0: i32, %arg1: i32, %arg2: i32) -> (i32, i32, i32) {
    %c1_i32 = arith.constant 1 : i32
    %0 = arith.muli %arg1, %c1_i32 : i32
    %1 = arith.addi %0, %arg2 : i32
    %c0_i32 = arith.constant 0 : i32
    %c0_i32_0 = arith.constant 0 : i32
    return %arg0, %c0_i32, %1 : i32, i32, i32
  }
  func.func @transform_1(%arg0: i32, %arg1: i32, %arg2: i32) -> (i32, i32, i32) {
    %c1_i32 = arith.constant 1 : i32
    %0 = arith.muli %arg1, %c1_i32 : i32
    %1 = arith.addi %0, %arg2 : i32
    %c0_i32 = arith.constant 0 : i32
    %c0_i32_0 = arith.constant 0 : i32
    return %arg0, %c0_i32, %1 : i32, i32, i32
  }
  func.func @transform_2(%arg0: i32, %arg1: i32, %arg2: i32) -> (i32, i32) {
    %c0_i32 = arith.constant 0 : i32
    %c0_i32_0 = arith.constant 0 : i32
    %c0_i32_1 = arith.constant 0 : i32
    return %c0_i32, %c0_i32_0 : i32, i32
  }
  func.func @transform_3(%arg0: i32, %arg1: i32, %arg2: i32) -> (i32, i32) {
    %c0_i32 = arith.constant 0 : i32
    %c0_i32_0 = arith.constant 0 : i32
    %c0_i32_1 = arith.constant 0 : i32
    return %c0_i32, %c0_i32_0 : i32, i32
  }
  func.func @transform_4(%arg0: i32, %arg1: i32, %arg2: i32) -> (i32, i32) {
    %c0_i32 = arith.constant 0 : i32
    %c0_i32_0 = arith.constant 0 : i32
    %c0_i32_1 = arith.constant 0 : i32
    return %c0_i32, %c0_i32_0 : i32, i32
  }
  func.func @transform_5(%arg0: i32, %arg1: i32, %arg2: i32) -> (i32, i32) {
    %c0_i32 = arith.constant 0 : i32
    %c0_i32_0 = arith.constant 0 : i32
    %c0_i32_1 = arith.constant 0 : i32
    return %c0_i32, %c0_i32_0 : i32, i32
  }
  func.func @transform_6(%arg0: i32, %arg1: i32, %arg2: i32) -> (i32, i32, i32, i32) {
    %c0_i32 = arith.constant 0 : i32
    %c0_i32_0 = arith.constant 0 : i32
    %c0_i32_1 = arith.constant 0 : i32
    return %arg0, %arg1, %c0_i32, %c0_i32_0 : i32, i32, i32, i32
  }
}

</mosaic_0001>

<llo_original>
// kernel: tpu_custom_call.1
$region0: #{tpu_custom_call.1}
  #allocation0 [shape = 'u32[]', space=smem, size = 0x4, offset = 0x4, fixed_abs, tag = 'smem constant byte address 0x4 - core index']
  #allocation1 [shape = 'u32[144,128]{1,0:T(1,128)}', space=vmem, size = 0x12000, scoped, tag = 'internal scratch']
  %s0 = inlined_call_operand.vmem [shape: f32[2,4,256], index: 0, kind: input, shape index: {}]
  %s1 = inlined_call_operand.vmem [shape: f32[2,6,256], index: 1, kind: input, shape index: {}]
  %s2 = inlined_call_operand.vmem [shape: f32[5,4], index: 2, kind: input, shape index: {}]
  %s3 = inlined_call_operand.vmem [shape: f32[5,1], index: 3, kind: input, shape index: {}]
  %s4 = inlined_call_operand.vmem [shape: f32[5,6], index: 4, kind: input, shape index: {}]
  %s5 = inlined_call_operand.vmem [shape: f32[5,1], index: 5, kind: input, shape index: {}]
  %s6 = inlined_call_operand.vmem [shape: f32[2,1,5,128], index: 6, kind: output, shape index: {}]
  %s7 = sld [smem:[#allocation0]]
  $region61: #{tpu_custom_call.1} parent=0
    _
  %s9 = ssub.s32 1, %s7
  %s10 = scalar_select 0, %s9, %s7
  loop: start=0, step=1, limit=4
  $region2: #{tpu_custom_call.1} parent=0 // loop_pre_header
    _
  $region3: #{tpu_custom_call.1} parent=0 // loop_header
    %s12 = sphi 0, %s16
    %p13 = scmp.ge.s32.totalorder %s12, 4
    %s19 = sphi 0, %s38
    %s20 = sphi 0, %s34
    %s21 = sphi 0, %s30
    %s22 = sphi 0, %s19
    %s23 = sphi 0, %s20
    %s24 = sphi 0, %s21
    %s25 = sphi 0, %s22
    %s26 = sphi 0, %s23
    %s27 = sphi 0, %s24
    %s45 = sphi 0, %s47
    %s48 = sphi 0, %s45
    %s49 = sphi 0, %s48
    %s65 = sphi 0, %s49
    %s75 = sphi 0, %s77
    %s78 = sphi 0, %s75
    %s79 = sphi 0, %s78
    %s95 = sphi 0, %s79
    %s99 = sphi 0, %s99
    %s101 = sphi 0, %s99
    %s102 = sphi 0, %s101
    %s116 = sphi 0, %s102
    %s120 = sphi 0, %s120
    %s122 = sphi 0, %s120
    %s123 = sphi 0, %s122
    %s137 = sphi 0, %s123
    %s141 = sphi 0, %s141
    %s143 = sphi 0, %s141
    %s144 = sphi 0, %s143
    %s158 = sphi 0, %s144
    %s162 = sphi 0, %s162
    %s164 = sphi 0, %s162
    %s165 = sphi 0, %s164
    %s179 = sphi 0, %s165
    %s187 = sphi 0, %s189
    %s190 = sphi 0, %s187
    %s191 = sphi 0, %s190
    %s207 = sphi 0, %s191
  $region4: #{tpu_custom_call.1} parent=0 // loop_header_branch
    %15 = sbr.rel (%p13) target = $region8
  $region5: #{tpu_custom_call.1} parent=0 // loop_body
    %s17 = ssub.s32 %s12, 1
    %s18 = ssub.s32 %s12, 2
    %s28 = sadd.s32 1, %s21
    %p29 = scmp.ge.s32.totalorder %s28, 1
    %s30 = scalar_select %p29, 0, %s28
    %s31 = sadd.s32 1, %s20
    %s32 = scalar_select %p29, %s31, %s20
    %p33 = scmp.ge.s32.totalorder %s32, 1
    %s34 = scalar_select %p33, 0, %s32
    %s35 = sadd.s32 1, %s19
    %s36 = scalar_select %p33, %s35, %s19
    %p37 = scmp.ge.s32.totalorder %s36, 2
    %s38 = scalar_select %p37, 0, %s36
    %s39 = sadd.s32 %s20, %s21
    %s40 = sadd.s32 %s34, %s30
    %s41 = ssub.s32 %s19, %s38
    %s42 = ssub.s32 %s39, %s40
    %s43 = sor.u32 %s41, %s42
    %p44 = scmp.eq.s32.totalorder %s43, 0
    %s46 = sadd.s32 %s45, 1
    %s47 = scalar_select %p44, %s45, %s46
    %p50 = pneg %p44
    %p51 = scmp.eq.s32.totalorder %s12, 1
    %p52 = por %p50, %p51
    %p53 = scmp.ne.s32.totalorder %s45, %s48
    %p54 = scmp.eq.s32.totalorder %s12, 0
    %p55 = por %p53, %p54
    %p56 = scmp.ne.s32.totalorder %s45, %s48
    %p57 = scmp.eq.s32.totalorder %s17, 1
    %p58 = por %p56, %p57
    %p59 = scmp.ne.s32.totalorder %s48, %s49
    %p60 = scmp.eq.s32.totalorder %s17, 0
    %p61 = por %p59, %p60
    %p62 = scmp.ne.s32.totalorder %s48, %s49
    %p63 = scmp.eq.s32.totalorder %s18, 1
    %p64 = por %p62, %p63
    %p66 = scmp.ne.s32.totalorder %s49, %s65
    %p67 = scmp.eq.s32.totalorder %s18, 0
    %p68 = por %p66, %p67
    %s69 = sadd.s32 %s20, %s21
    %s70 = sadd.s32 %s34, %s30
    %s71 = ssub.s32 %s19, %s38
    %s72 = ssub.s32 %s69, %s70
    %s73 = sor.u32 %s71, %s72
    %p74 = scmp.eq.s32.totalorder %s73, 0
    %s76 = sadd.s32 %s75, 1
    %s77 = scalar_select %p74, %s75, %s76
    %p80 = pneg %p74
    %p81 = scmp.eq.s32.totalorder %s12, 1
    %p82 = por %p80, %p81
    %p83 = scmp.ne.s32.totalorder %s75, %s78
    %p84 = scmp.eq.s32.totalorder %s12, 0
    %p85 = por %p83, %p84
    %p86 = scmp.ne.s32.totalorder %s75, %s78
    %p87 = scmp.eq.s32.totalorder %s17, 1
    %p88 = por %p86, %p87
    %p89 = scmp.ne.s32.totalorder %s78, %s79
    %p90 = scmp.eq.s32.totalorder %s17, 0
    %p91 = por %p89, %p90
    %p92 = scmp.ne.s32.totalorder %s78, %s79
    %p93 = scmp.eq.s32.totalorder %s18, 1
    %p94 = por %p92, %p93
    %p96 = scmp.ne.s32.totalorder %s79, %s95
    %p97 = scmp.eq.s32.totalorder %s18, 0
    %p98 = por %p96, %p97
    %s100 = sadd.s32 %s99, 1
    %p103 = scmp.eq.s32.totalorder %s12, 1
    %p104 = scmp.ne.s32.totalorder %s99, %s101
    %p105 = scmp.eq.s32.totalorder %s12, 0
    %p106 = por %p104, %p105
    %p107 = scmp.ne.s32.totalorder %s99, %s101
    %p108 = scmp.eq.s32.totalorder %s17, 1
    %p109 = por %p107, %p108
    %p110 = scmp.ne.s32.totalorder %s101, %s102
    %p111 = scmp.eq.s32.totalorder %s17, 0
    %p112 = por %p110, %p111
    %p113 = scmp.ne.s32.totalorder %s101, %s102
    %p114 = scmp.eq.s32.totalorder %s18, 1
    %p115 = por %p113, %p114
    %p117 = scmp.ne.s32.totalorder %s102, %s116
    %p118 = scmp.eq.s32.totalorder %s18, 0
    %p119 = por %p117, %p118
    %s121 = sadd.s32 %s120, 1
    %p124 = scmp.eq.s32.totalorder %s12, 1
    %p125 = scmp.ne.s32.totalorder %s120, %s122
    %p126 = scmp.eq.s32.totalorder %s12, 0
    %p127 = por %p125, %p126
    %p128 = scmp.ne.s32.totalorder %s120, %s122
    %p129 = scmp.eq.s32.totalorder %s17, 1
    %p130 = por %p128, %p129
    %p131 = scmp.ne.s32.totalorder %s122, %s123
    %p132 = scmp.eq.s32.totalorder %s17, 0
    %p133 = por %p131, %p132
    %p134 = scmp.ne.s32.totalorder %s122, %s123
    %p135 = scmp.eq.s32.totalorder %s18, 1
    %p136 = por %p134, %p135
    %p138 = scmp.ne.s32.totalorder %s123, %s137
    %p139 = scmp.eq.s32.totalorder %s18, 0
    %p140 = por %p138, %p139
    %s142 = sadd.s32 %s141, 1
    %p145 = scmp.eq.s32.totalorder %s12, 1
    %p146 = scmp.ne.s32.totalorder %s141, %s143
    %p147 = scmp.eq.s32.totalorder %s12, 0
    %p148 = por %p146, %p147
    %p149 = scmp.ne.s32.totalorder %s141, %s143
    %p150 = scmp.eq.s32.totalorder %s17, 1
    %p151 = por %p149, %p150
    %p152 = scmp.ne.s32.totalorder %s143, %s144
    %p153 = scmp.eq.s32.totalorder %s17, 0
    %p154 = por %p152, %p153
    %p155 = scmp.ne.s32.totalorder %s143, %s144
    %p156 = scmp.eq.s32.totalorder %s18, 1
    %p157 = por %p155, %p156
    %p159 = scmp.ne.s32.totalorder %s144, %s158
    %p160 = scmp.eq.s32.totalorder %s18, 0
    %p161 = por %p159, %p160
    %s163 = sadd.s32 %s162, 1
    %p166 = scmp.eq.s32.totalorder %s12, 1
    %p167 = scmp.ne.s32.totalorder %s162, %s164
    %p168 = scmp.eq.s32.totalorder %s12, 0
    %p169 = por %p167, %p168
    %p170 = scmp.ne.s32.totalorder %s162, %s164
    %p171 = scmp.eq.s32.totalorder %s17, 1
    %p172 = por %p170, %p171
    %p173 = scmp.ne.s32.totalorder %s164, %s165
    %p174 = scmp.eq.s32.totalorder %s17, 0
    %p175 = por %p173, %p174
    %p176 = scmp.ne.s32.totalorder %s164, %s165
    %p177 = scmp.eq.s32.totalorder %s18, 1
    %p178 = por %p176, %p177
    %p180 = scmp.ne.s32.totalorder %s165, %s179
    %p181 = scmp.eq.s32.totalorder %s18, 0
    %p182 = por %p180, %p181
    %s183 = ssub.s32 %s19, %s38
    %s184 = ssub.s32 %s20, %s34
    %s185 = sor.u32 %s183, %s184
    %p186 = scmp.eq.s32.totalorder %s185, 0
    %s188 = sadd.s32 %s187, 1
    %s189 = scalar_select %p186, %s187, %s188
    %p192 = pneg %p186
    %p193 = scmp.eq.s32.totalorder %s12, 1
    %p194 = por %p192, %p193
    %p195 = scmp.ne.s32.totalorder %s187, %s190
    %p196 = scmp.eq.s32.totalorder %s12, 0
    %p197 = por %p195, %p196
    %p198 = scmp.ne.s32.totalorder %s187, %s190
    %p199 = scmp.eq.s32.totalorder %s17, 1
    %p200 = por %p198, %p199
    %p201 = scmp.ne.s32.totalorder %s190, %s191
    %p202 = scmp.eq.s32.totalorder %s17, 0
    %p203 = por %p201, %p202
    %p204 = scmp.ne.s32.totalorder %s190, %s191
    %p205 = scmp.eq.s32.totalorder %s18, 1
    %p206 = por %p204, %p205
    %p208 = scmp.ne.s32.totalorder %s191, %s207
    %p209 = scmp.eq.s32.totalorder %s18, 0
    %p210 = por %p208, %p209
    %p211 = scmp.le.s32.totalorder 1, %s12
    %p212 = scmp.lt.s32.totalorder %s12, 3
    %p213 = pnand %p211, %p212
    %p214 = pneg %p213
    // Predicated region
    $region9: #{tpu_custom_call.1} parent=5 // pred_check
      _
    $region10: #{tpu_custom_call.1} parent=5 // pred_check_branch
      %216 = sbr.rel (%p213) target = $region12
    $region11: #{tpu_custom_call.1} parent=5 // pred_region
      %s217 = ssub.s32 %s12, 1
      // Predicated region
      $region13: #{tpu_custom_call.1} parent=11 // pred_check
        %p218 = pneg %p112
      $region14: #{tpu_custom_call.1} parent=11 // pred_check_branch
        %220 = sbr.rel (%p218) target = $region16
      $region15: #{tpu_custom_call.1} parent=11 // pred_region
        _
      $region16: #{tpu_custom_call.1} parent=11 // pred_fallthru
        _
      // Predicated region
      $region17: #{tpu_custom_call.1} parent=11 // pred_check
        %p221 = pneg %p133
      $region18: #{tpu_custom_call.1} parent=11 // pred_check_branch
        %223 = sbr.rel (%p221) target = $region20
      $region19: #{tpu_custom_call.1} parent=11 // pred_region
        _
      $region20: #{tpu_custom_call.1} parent=11 // pred_fallthru
        _
      // Predicated region
      $region21: #{tpu_custom_call.1} parent=11 // pred_check
        %p224 = pneg %p154
      $region22: #{tpu_custom_call.1} parent=11 // pred_check_branch
        %226 = sbr.rel (%p224) target = $region24
      $region23: #{tpu_custom_call.1} parent=11 // pred_region
        _
      $region24: #{tpu_custom_call.1} parent=11 // pred_fallthru
        _
      // Predicated region
      $region25: #{tpu_custom_call.1} parent=11 // pred_check
        %p227 = pneg %p175
      $region26: #{tpu_custom_call.1} parent=11 // pred_check_branch
        %229 = sbr.rel (%p227) target = $region28
      $region27: #{tpu_custom_call.1} parent=11 // pred_region
        _
      $region28: #{tpu_custom_call.1} parent=11 // pred_fallthru
        _
    $region12: #{tpu_custom_call.1} parent=5 // pred_fallthru
      _
    %p230 = scmp.lt.s32.totalorder %s12, 2
    // Predicated region
    $region29: #{tpu_custom_call.1} parent=5 // pred_check
      %p231 = pneg %p230
    $region30: #{tpu_custom_call.1} parent=5 // pred_check_branch
      %233 = sbr.rel (%p231) target = $region32
    $region31: #{tpu_custom_call.1} parent=5 // pred_region
      // Predicated region
      $region33: #{tpu_custom_call.1} parent=31 // pred_check
        %p234 = pneg %p55
      $region34: #{tpu_custom_call.1} parent=31 // pred_check_branch
        %236 = sbr.rel (%p234) target = $region36
      $region35: #{tpu_custom_call.1} parent=31 // pred_region
        %s237 = sadd.s32 %s20, %s21
        %s238 = smul.u32 2, %s237
        %p239 = scmp.lt.s32.totalorder %s19, 1
        %s240 = scalar_select %p239, %s19, 1
        %p241 = scmp.lt.s32.totalorder %s238, 1
        %s242 = scalar_select %p241, %s238, 1
        %s243 = smul.addr %s240, 2
        %s244 = sadd.s32 %s242, %s243
        %s245 = smul.addr %s244, 4
        %s246 = scalar_lea.vmem %s0, %s245
        %s247 = sadd.s32 %s20, %s21
        %s248 = smul.u32 2, %s247
      $region36: #{tpu_custom_call.1} parent=31 // pred_fallthru
        _
      // Predicated region
      $region37: #{tpu_custom_call.1} parent=31 // pred_check
        %p249 = pneg %p85
      $region38: #{tpu_custom_call.1} parent=31 // pred_check_branch
        %251 = sbr.rel (%p249) target = $region40
      $region39: #{tpu_custom_call.1} parent=31 // pred_region
        %s252 = sadd.s32 %s20, %s21
        %s253 = smul.u32 2, %s252
        %p254 = scmp.lt.s32.totalorder %s19, 1
        %s255 = scalar_select %p254, %s19, 1
        %p256 = scmp.lt.s32.totalorder %s253, 1
        %s257 = scalar_select %p256, %s253, 1
        %s258 = smul.addr %s255, 2
        %s259 = sadd.s32 %s257, %s258
        %s260 = smul.addr %s259, 8
        %s261 = scalar_lea.vmem %s1, %s260
        %s262 = sadd.s32 %s20, %s21
        %s263 = smul.u32 2, %s262
      $region40: #{tpu_custom_call.1} parent=31 // pred_fallthru
        _
    $region32: #{tpu_custom_call.1} parent=5 // pred_fallthru
      _
    %p264 = scmp.le.s32.totalorder 1, %s12
    %p265 = scmp.lt.s32.totalorder %s12, 3
    %p266 = pnand %p264, %p265
    %p267 = pneg %p266
    // Predicated region
    $region41: #{tpu_custom_call.1} parent=5 // pred_check
      _
    $region42: #{tpu_custom_call.1} parent=5 // pred_check_branch
      %269 = sbr.rel (%p266) target = $region44
    $region43: #{tpu_custom_call.1} parent=5 // pred_region
      %s270 = ssub.s32 %s12, 1
      %s271 = sadd.s32 %s23, %s24
      %s272 = smul.u32 2, %s271
      %p273 = scmp.lt.s32.totalorder %s22, 1
      %s274 = scalar_select %p273, %s22, 1
      %p275 = scmp.lt.s32.totalorder %s272, 1
      %s276 = scalar_select %p275, %s272, 1
      %s277 = smul.addr %s274, 2
      %s278 = sadd.s32 %s276, %s277
      %s279 = smul.addr %s278, 4
      %s280 = scalar_lea.vmem %s0, %s279
      %p281 = pneg %p61
      %p282 = pneg %p58
      %s283 = sadd.s32 %s23, %s24
      %s284 = smul.u32 2, %s283
      %p285 = scmp.lt.s32.totalorder %s22, 1
      %s286 = scalar_select %p285, %s22, 1
      %p287 = scmp.lt.s32.totalorder %s284, 1
      %s288 = scalar_select %p287, %s284, 1
      %s289 = smul.addr %s286, 2
      %s290 = sadd.s32 %s288, %s289
      %s291 = smul.addr %s290, 8
      %s292 = scalar_lea.vmem %s1, %s291
      %p293 = pneg %p91
      %p294 = pneg %p88
      %p295 = pneg %p112
      %p296 = pneg %p109
      %p297 = pneg %p133
      %p298 = pneg %p130
      %p299 = pneg %p154
      %p300 = pneg %p151
      %p301 = pneg %p175
      %p302 = pneg %p172
      %p303 = pneg %p203
      %p304 = pneg %p200
      %p305 = scmp.lt.s32.totalorder %s22, 1
      %s306 = scalar_select %p305, %s22, 1
      %p307 = scmp.lt.s32.totalorder %s23, 0
      %s308 = scalar_select %p307, %s23, 0
      %s309 = sadd.s32 %s308, %s306
      %s310 = smul.addr %s309, 8
      %s311 = scalar_lea.vmem %s6, %s310
      %s312 = sadd.s32 %s23, %s24
      %s313 = smul.u32 2, %s312
      %p314 = scmp.lt.s32.totalorder %s22, 1
      %s315 = scalar_select %p314, %s22, 1
      %p316 = scmp.lt.s32.totalorder %s313, 1
      %s317 = scalar_select %p316, %s313, 1
      %s318 = smul.addr %s315, 2
      %s319 = sadd.s32 %s317, %s318
      %s320 = smul.addr %s319, 4
      %s321 = scalar_lea.vmem %s0, %s320
      %s322 = sadd.s32 %s23, %s24
      %s323 = smul.u32 2, %s322
      %s324 = sadd.s32 %s23, %s24
      %s325 = smul.u32 2, %s324
      %p326 = scmp.lt.s32.totalorder %s22, 1
      %s327 = scalar_select %p326, %s22, 1
      %p328 = scmp.lt.s32.totalorder %s325, 1
      %s329 = scalar_select %p328, %s325, 1
      %s330 = smul.addr %s327, 2
      %s331 = sadd.s32 %s329, %s330
      %s332 = smul.addr %s331, 8
      %s333 = scalar_lea.vmem %s1, %s332
      %s334 = sadd.s32 %s23, %s24
      %s335 = smul.u32 2, %s334
      %p336 = scmp.lt.s32.totalorder %s22, 1
      %s337 = scalar_select %p336, %s22, 1
      %p338 = scmp.lt.s32.totalorder %s23, 0
      %s339 = scalar_select %p338, %s23, 0
      %s340 = sadd.s32 %s339, %s337
      %s341 = smul.addr %s340, 8
      %s342 = scalar_lea.vmem %s6, %s341
      %p343 = scmp.eq.s32.totalorder %s24, 0
      // Predicated region
      $region45: #{tpu_custom_call.1} parent=43 // pred_check
        %p344 = pneg %p343
      $region46: #{tpu_custom_call.1} parent=43 // pred_check_branch
        %346 = sbr.rel (%p344) target = $region48
      $region47: #{tpu_custom_call.1} parent=43 // pred_region
        %347 = vst [vmem:[%s342] sm:$0x1f] 0.0
      $region48: #{tpu_custom_call.1} parent=43 // pred_fallthru
        _
      %v348 = vld [vmem:[%s321] sm:$0xff]
      %v349 = vld [vmem:[%s333] sm:$0x3f]
      %v350 = vld [vmem:[%s333 + $0x8] sm:$0x3f]
      %v351 = vld [vmem:[%s2] sm:$0x1f]
      %v352 = vld [vmem:[%s3] sm:$0x1f]
      %354 = vset.pattern.permute.xlu0 0
      %355 = vperm.xlu0 %354, %v352
      %v356 = vpop.permute.xlu0 %355
      %v359 = vcombine.high %v348, %v348
      %vm360 = vcmask 31744
      %v362 = vsel %vm360, %v351, 0
      %vm364 = vcmask 1043456
      %v365 = vsel %vm364, %v348, 0
      %v367 = vsel %vm364, %v359, 0
      %369 = vmatprep.subr.mxu0 0.0
      %370 = vmatpush1.msra.mxu0 0.0
      %371 = vmatprep.subr.mxu0 0.0
      %372 = vmatpush1.msra.mxu0 0.0
      %373 = vmatprep.subr.mxu0 0.0
      %374 = vmatpush1.msra.mxu0 0.0
      %375 = vmatprep.subr.mxu0 0.0
      %376 = vmatpush1.msra.mxu0 0.0
      %377 = vmatprep.subr.mxu0 0.0
      %378 = vmatpush1.msra.mxu0 0.0
      %379 = vmatprep.subr.mxu0 0.0
      %380 = vmatpush1.msra.mxu0 0.0
      %381 = vmatprep.subr.mxu0 0.0
      %382 = vmatpush1.msra.mxu0 0.0
      %383 = vmatprep.subr.mxu0 0.0
      %384 = vmatpush1.msra.mxu0 0.0
      %385 = vmatprep.subr.mxu0 0.0
      %386 = vmatpush1.msra.mxu0 0.0
      %387 = vmatprep.subr.mxu0 0.0
      %388 = vmatpush1.msra.mxu0 0.0
      %389 = vmatprep.subr.mxu0 0.0
      %390 = vmatpush1.msra.mxu0 0.0
      %391 = vmatprep.subr.mxu0 0.0
      %392 = vmatpush1.msra.mxu0 0.0
      %393 = vmatprep.subr.mxu0 0.0
      %394 = vmatpush1.msra.mxu0 0.0
      %395 = vmatprep.subr.mxu0 0.0
      %396 = vmatpush1.msra.mxu0 0.0
      %397 = vmatprep.subr.mxu0 0.0
      %398 = vmatpush1.msra.mxu0 0.0
      %399 = vmatprep.subr.mxu0 %v367
      %400 = vmatpush1.msra.mxu0 %v365
      %401 = vmatprep.subr.mxu0 0.0
      %402 = vmatpush2.msra.mxu0 0.0
      %403 = vmatprep.subr.mxu0 0.0
      %404 = vmatpush2.msra.mxu0 0.0
      %405 = vmatprep.subr.mxu0 0.0
      %406 = vmatpush2.msra.mxu0 0.0
      %407 = vmatprep.subr.mxu0 0.0
      %408 = vmatpush2.msra.mxu0 0.0
      %409 = vmatprep.subr.mxu0 0.0
      %410 = vmatpush2.msra.mxu0 0.0
      %411 = vmatprep.subr.mxu0 0.0
      %412 = vmatpush2.msra.mxu0 0.0
      %413 = vmatprep.subr.mxu0 0.0
      %414 = vmatpush2.msra.mxu0 0.0
      %415 = vmatprep.subr.mxu0 0.0
      %416 = vmatpush2.msra.mxu0 0.0
      %417 = vmatprep.subr.mxu0 0.0
      %418 = vmatpush2.msra.mxu0 0.0
      %419 = vmatprep.subr.mxu0 0.0
      %420 = vmatpush2.msra.mxu0 0.0
      %421 = vmatprep.subr.mxu0 0.0
      %422 = vmatpush2.msra.mxu0 0.0
      %423 = vmatprep.subr.mxu0 0.0
      %424 = vmatpush2.msra.mxu0 0.0
      %425 = vmatprep.subr.mxu0 0.0
      %426 = vmatpush2.msra.mxu0 0.0
      %427 = vmatprep.subr.mxu0 0.0
      %428 = vmatpush2.msra.mxu0 0.0
      %429 = vmatprep.subr.mxu0 0.0
      %430 = vmatpush2.msra.mxu0 0.0
      %431 = vmatprep.subr.mxu0 0.0
      %432 = vmatpush2.msra.mxu0 0.0
      %433 = vmatprep.mubr.f32.mxu0 0.0
      %434 = vmatmul.mubr.f32.gmra.mxu0 %v362
      %v435 = vpop.f32.mrf.mxu0
      %v436 = vadd.f32 %v356, %v435
      %v437 = vpop.f32.mrf.mxu0
      %v438 = vadd.f32 %v356, %v437
      %439 = vdwg.mxu0
      %v440 = vld [vmem:[%s4] sm:$0x1f]
      %v441 = vld [vmem:[%s5] sm:$0x1f]
      %443 = vset.pattern.permute.xlu0 0
      %444 = vperm.xlu0 %443, %v441
      %v445 = vpop.permute.xlu0 %444
      %vm447 = vcmask 48128
      %v449 = vsel %vm447, %v440, 0
      %vm451 = vcmask 1045504
      %v453 = vsel %vm451, %v349, 0
      %v456 = vsel %vm451, %v350, 0
      %458 = vmatprep.subr.mxu0 0.0
      %459 = vmatpush1.msra.mxu0 0.0
      %460 = vmatprep.subr.mxu0 0.0
      %461 = vmatpush1.msra.mxu0 0.0
      %462 = vmatprep.subr.mxu0 0.0
      %463 = vmatpush1.msra.mxu0 0.0
      %464 = vmatprep.subr.mxu0 0.0
      %465 = vmatpush1.msra.mxu0 0.0
      %466 = vmatprep.subr.mxu0 0.0
      %467 = vmatpush1.msra.mxu0 0.0
      %468 = vmatprep.subr.mxu0 0.0
      %469 = vmatpush1.msra.mxu0 0.0
      %470 = vmatprep.subr.mxu0 0.0
      %471 = vmatpush1.msra.mxu0 0.0
      %472 = vmatprep.subr.mxu0 0.0
      %473 = vmatpush1.msra.mxu0 0.0
      %474 = vmatprep.subr.mxu0 0.0
      %475 = vmatpush1.msra.mxu0 0.0
      %476 = vmatprep.subr.mxu0 0.0
      %477 = vmatpush1.msra.mxu0 0.0
      %478 = vmatprep.subr.mxu0 0.0
      %479 = vmatpush1.msra.mxu0 0.0
      %480 = vmatprep.subr.mxu0 0.0
      %481 = vmatpush1.msra.mxu0 0.0
      %482 = vmatprep.subr.mxu0 0.0
      %483 = vmatpush1.msra.mxu0 0.0
      %484 = vmatprep.subr.mxu0 0.0
      %485 = vmatpush1.msra.mxu0 0.0
      %486 = vmatprep.subr.mxu0 0.0
      %487 = vmatpush1.msra.mxu0 0.0
      %488 = vmatprep.subr.mxu0 %v456
      %489 = vmatpush1.msra.mxu0 %v453
      %490 = vmatprep.subr.mxu0 0.0
      %491 = vmatpush2.msra.mxu0 0.0
      %492 = vmatprep.subr.mxu0 0.0
      %493 = vmatpush2.msra.mxu0 0.0
      %494 = vmatprep.subr.mxu0 0.0
      %495 = vmatpush2.msra.mxu0 0.0
      %496 = vmatprep.subr.mxu0 0.0
      %497 = vmatpush2.msra.mxu0 0.0
      %498 = vmatprep.subr.mxu0 0.0
      %499 = vmatpush2.msra.mxu0 0.0
      %500 = vmatprep.subr.mxu0 0.0
      %501 = vmatpush2.msra.mxu0 0.0
      %502 = vmatprep.subr.mxu0 0.0
      %503 = vmatpush2.msra.mxu0 0.0
      %504 = vmatprep.subr.mxu0 0.0
      %505 = vmatpush2.msra.mxu0 0.0
      %506 = vmatprep.subr.mxu0 0.0
      %507 = vmatpush2.msra.mxu0 0.0
      %508 = vmatprep.subr.mxu0 0.0
      %509 = vmatpush2.msra.mxu0 0.0
      %510 = vmatprep.subr.mxu0 0.0
      %511 = vmatpush2.msra.mxu0 0.0
      %512 = vmatprep.subr.mxu0 0.0
      %513 = vmatpush2.msra.mxu0 0.0
      %514 = vmatprep.subr.mxu0 0.0
      %515 = vmatpush2.msra.mxu0 0.0
      %516 = vmatprep.subr.mxu0 0.0
      %517 = vmatpush2.msra.mxu0 0.0
      %518 = vmatprep.subr.mxu0 0.0
      %519 = vmatpush2.msra.mxu0 0.0
      %520 = vmatprep.subr.mxu0 0.0
      %521 = vmatpush2.msra.mxu0 0.0
      %522 = vmatprep.mubr.f32.mxu0 0.0
      %523 = vmatmul.mubr.f32.gmra.mxu0 %v449
      %v524 = vpop.f32.mrf.mxu0
      %v525 = vadd.f32 %v445, %v524
      %v526 = vpop.f32.mrf.mxu0
      %v527 = vadd.f32 %v445, %v526
      %528 = vdwg.mxu0
      %vm529 = vcmask 1044480
      %v530 = vsel %vm529, %v436, -inf
      %v531 = vrot.slane %v530, 4
      %v532 = vmax.f32 %v530, %v531
      %v533 = vrot.slane %v532, 2
      %v534 = vmax.f32 %v532, %v533
      %v535 = vrot.slane %v534, 1
      %v536 = vmax.f32 %v534, %v535
      %v537 = vsel %vm529, %v438, -inf
      %v538 = vrot.slane %v537, 4
      %v539 = vmax.f32 %v537, %v538
      %v540 = vrot.slane %v539, 2
      %v541 = vmax.f32 %v539, %v540
      %v542 = vrot.slane %v541, 1
      %v543 = vmax.f32 %v541, %v542
      %v544 = vsub.f32 %v436, %v536
      %v545 = vsub.f32 %v438, %v543
      %v546 = vmul.f32 %v544, 1.442695
      %v547 = vpow.pop %v546
      %v548 = vmul.f32 %v545, 1.442695
      %v549 = vpow.pop %v548
      %v550 = vsel %vm529, %v547, 0.0
      %v551 = vrot.slane %v550, 4
      %v552 = vadd.f32 %v550, %v551
      %v553 = vrot.slane %v552, 2
      %v554 = vadd.f32 %v552, %v553
      %v555 = vrot.slane %v554, 1
      %v556 = vadd.f32 %v554, %v555
      %v557 = vsel %vm529, %v549, 0.0
      %v558 = vrot.slane %v557, 4
      %v559 = vadd.f32 %v557, %v558
      %v560 = vrot.slane %v559, 2
      %v561 = vadd.f32 %v559, %v560
      %v562 = vrot.slane %v561, 1
      %v563 = vadd.f32 %v561, %v562
      %v564 = vlog2.pop %v556
      %v565 = vmul.f32 %v564, 0.6931472
      %v566 = vlog2.pop %v563
      %v567 = vmul.f32 %v566, 0.6931472
      %v568 = vsub.f32 %v544, %v565
      %v569 = vsub.f32 %v545, %v567
      %v570 = vsel %vm529, %v525, -inf
      %v571 = vrot.slane %v570, 4
      %v572 = vmax.f32 %v570, %v571
      %v573 = vrot.slane %v572, 2
      %v574 = vmax.f32 %v572, %v573
      %v575 = vrot.slane %v574, 1
      %v576 = vmax.f32 %v574, %v575
      %v577 = vsel %vm529, %v527, -inf
      %v578 = vrot.slane %v577, 4
      %v579 = vmax.f32 %v577, %v578
      %v580 = vrot.slane %v579, 2
      %v581 = vmax.f32 %v579, %v580
      %v582 = vrot.slane %v581, 1
      %v583 = vmax.f32 %v581, %v582
      %v584 = vsub.f32 %v525, %v576
      %v585 = vsub.f32 %v527, %v583
      %v586 = vmul.f32 %v584, 1.442695
      %v587 = vpow.pop %v586
      %v588 = vmul.f32 %v585, 1.442695
      %v589 = vpow.pop %v588
      %v590 = vsel %vm529, %v587, 0.0
      %v591 = vrot.slane %v590, 4
      %v592 = vadd.f32 %v590, %v591
      %v593 = vrot.slane %v592, 2
      %v594 = vadd.f32 %v592, %v593
      %v595 = vrot.slane %v594, 1
      %v596 = vadd.f32 %v594, %v595
      %v597 = vsel %vm529, %v589, 0.0
      %v598 = vrot.slane %v597, 4
      %v599 = vadd.f32 %v597, %v598
      %v600 = vrot.slane %v599, 2
      %v601 = vadd.f32 %v599, %v600
      %v602 = vrot.slane %v601, 1
      %v603 = vadd.f32 %v601, %v602
      %v604 = vrcp.pop %v596
      %v605 = vmul.f32 1.0, %v604
      %v606 = vrcp.pop %v603
      %v607 = vmul.f32 1.0, %v606
      %v608 = vmul.f32 %v587, %v605
      %v609 = vmul.f32 %v589, %v607
      %v610 = vlog2.pop %v596
      %v611 = vmul.f32 %v610, 0.6931472
      %v612 = vlog2.pop %v603
      %v613 = vmul.f32 %v612, 0.6931472
      %v614 = vsub.f32 %v584, %v611
      %v615 = vsub.f32 %v585, %v613
      %v616 = vsub.f32 %v614, %v568
      %v617 = vsub.f32 %v615, %v569
      %v618 = vmul.f32 %v608, %v616
      %v619 = vmul.f32 %v609, %v617
      %v620 = vadd.f32 %v618, %v619
      %v621 = vld [vmem:[%s342] sm:$0x1f]
      %v622 = vadd.f32 %v621, %v620
      %623 = vst [vmem:[%s342] sm:$0x1f] %v622
      %p624 = scmp.lt.s32.totalorder %s22, 1
      %s625 = scalar_select %p624, %s22, 1
      %p626 = scmp.lt.s32.totalorder %s23, 0
      %s627 = scalar_select %p626, %s23, 0
      %s628 = sadd.s32 %s627, %s625
      %s629 = smul.addr %s628, 8
      %s630 = scalar_lea.vmem %s6, %s629
      // Predicated region
      $region49: #{tpu_custom_call.1} parent=43 // pred_check
        %p631 = pneg %p200
      $region50: #{tpu_custom_call.1} parent=43 // pred_check_branch
        %633 = sbr.rel (%p631) target = $region52
      $region51: #{tpu_custom_call.1} parent=43 // pred_region
        _
      $region52: #{tpu_custom_call.1} parent=43 // pred_fallthru
        _
    $region44: #{tpu_custom_call.1} parent=5 // pred_fallthru
      _
    %p634 = scmp.le.s32.totalorder 2, %s12
    // Predicated region
    $region53: #{tpu_custom_call.1} parent=5 // pred_check
      %p635 = pneg %p634
    $region54: #{tpu_custom_call.1} parent=5 // pred_check_branch
      %637 = sbr.rel (%p635) target = $region56
    $region55: #{tpu_custom_call.1} parent=5 // pred_region
      %s638 = ssub.s32 %s12, 2
      // Predicated region
      $region57: #{tpu_custom_call.1} parent=55 // pred_check
        %p639 = pneg %p206
      $region58: #{tpu_custom_call.1} parent=55 // pred_check_branch
        %641 = sbr.rel (%p639) target = $region60
      $region59: #{tpu_custom_call.1} parent=55 // pred_region
        %p642 = scmp.lt.s32.totalorder %s25, 1
        %s643 = scalar_select %p642, %s25, 1
        %p644 = scmp.lt.s32.totalorder %s26, 0
        %s645 = scalar_select %p644, %s26, 0
        %s646 = sadd.s32 %s645, %s643
        %s647 = smul.addr %s646, 8
        %s648 = scalar_lea.vmem %s6, %s647
      $region60: #{tpu_custom_call.1} parent=55 // pred_fallthru
        _
    $region56: #{tpu_custom_call.1} parent=5 // pred_fallthru
      _
  $region6: #{tpu_custom_call.1} parent=0 // loop_footer
    %s16 = sadd.s32 1, %s12
  $region7: #{tpu_custom_call.1} parent=0 // loop_footer_branch
    %11 = sbr.rel target = $region3
  $region8: #{tpu_custom_call.1} parent=0 // loop_exit
    _

</llo_original>
